<compile_context>
chip_gen: v7x
topology: tpu7x:2x2x1
jax: 0.10.0
libtpu: 0.0.40
codegen_flags: <defaults>
</compile_context>

<pallas_src>
import math

import jax
import jax.numpy as jnp
import numpy as np
from jax.experimental import pallas as pl
from jax.experimental.pallas import tpu as pltpu

# OPU hardware constants (class OPU in the reference)
INPUT_VECTOR_LEN = 64
BITS = 4
QMAX = 2.0 ** (BITS - 1) - 1.0          # 7
OUT_SCALE_MAX = 2.0 ** BITS - 1.0       # 15


def _pick_tile(n, candidates):
    """Largest candidate tile dividing n, else the full dimension."""
    for c in candidates:
        if n % c == 0:
            return c
    return n


def _pick_chunks_per_step(repeats):
    """How many 64-wide chunks to process per grid step.

    CH*64 must be a multiple of 128 (lane constraint) unless it covers the
    full (padded) feature dim, so we only accept even CH or CH == repeats.
    """
    for ch in (16, 8, 4, 2):
        if repeats % ch == 0:
            return ch
    return repeats  # odd repeats (incl. 1): single step over the full D


def _make_kernel(ch, nk):
    def onn_fc_kernel(x_ref, w_ref, o_ref):
        # Grid = (B tiles, O tiles[, reduction over chunk-groups]).
        if nk > 1:
            @pl.when(pl.program_id(2) == 0)
            def _init():
                o_ref[...] = jnp.zeros_like(o_ref)

        acc = jnp.zeros(o_ref.shape, jnp.float32)
        for c in range(ch):  # statically unrolled 64-wide OPU dots
            sl = slice(c * INPUT_VECTOR_LEN, (c + 1) * INPUT_VECTOR_LEN)
            # bf16 x bf16 -> f32 on the MXU.  Clamp to [-128,127] is skipped
            # (sign-preserving); only the sign feeds the optical threshold.
            s = jnp.dot(x_ref[:, sl], w_ref[sl, :],
                        preferred_element_type=jnp.float32)
            acc = acc + (s >= 0.0).astype(jnp.float32)

        if nk > 1:
            o_ref[...] += acc
        else:
            o_ref[...] = acc

    return onn_fc_kernel


def onn_fc_forward(x, weight, bias=None):
    B, D = x.shape
    Dw, O = weight.shape
    assert D == Dw, "last dim of input must equal input_dimension"

    repeats = -(-D // INPUT_VECTOR_LEN)
    Dp = repeats * INPUT_VECTOR_LEN

    # --- glue (plain JAX, one pass): quantize W once, pad, cast to bf16 ----
    w_scale = OUT_SCALE_MAX / (weight.max() - weight.min() + 1e-9)
    wq = jnp.clip(jnp.round(weight.astype(jnp.float32) * w_scale), -QMAX, QMAX)
    wq = jnp.pad(wq, ((0, Dp - D), (0, 0))).astype(jnp.bfloat16)

    # Activations stay flat (B, Dp); bf16 operands halve activation traffic.
    # For quantized/integer-valued OPU inputs this is exact; for arbitrary f32
    # inputs only chunk sums within bf16 rounding of zero could flip threshold.
    x_p = jnp.pad(x.astype(jnp.bfloat16), ((0, 0), (0, Dp - D)))

    ch = _pick_chunks_per_step(repeats)
    nk = repeats // ch
    b_tile = _pick_tile(B, (512, 256, 128))
    o_tile = _pick_tile(O, (1024, 512, 256, 128))
    kblk = ch * INPUT_VECTOR_LEN

    if nk > 1:
        grid = (B // b_tile, O // o_tile, nk)
        x_spec = pl.BlockSpec((b_tile, kblk), lambda i, j, k: (i, k))
        w_spec = pl.BlockSpec((kblk, o_tile), lambda i, j, k: (k, j))
        o_spec = pl.BlockSpec((b_tile, o_tile), lambda i, j, k: (i, j))
        dim_sem = ("parallel", "parallel", "arbitrary")
    else:
        grid = (B // b_tile, O // o_tile)
        x_spec = pl.BlockSpec((b_tile, kblk), lambda i, j: (i, 0))
        w_spec = pl.BlockSpec((kblk, o_tile), lambda i, j: (0, j))
        o_spec = pl.BlockSpec((b_tile, o_tile), lambda i, j: (i, j))
        dim_sem = ("parallel", "parallel")

    out = pl.pallas_call(
        _make_kernel(ch, nk),
        out_shape=jax.ShapeDtypeStruct((B, O), jnp.float32),
        grid_spec=pltpu.PrefetchScalarGridSpec(
            num_scalar_prefetch=0,
            grid=grid,
            in_specs=[x_spec, w_spec],
            out_specs=o_spec,
        ),
        compiler_params=pltpu.CompilerParams(dimension_semantics=dim_sem),
    )(x_p, wq)

    if bias is not None:
        out = out + bias
    return out


def onn_fc_reference(x, weight, bias=None):
    """Pure-JAX reference mirroring the PyTorch forward (exact f32 math)."""
    B, D = x.shape
    O = weight.shape[1]
    repeats = -(-D // INPUT_VECTOR_LEN)
    Dp = repeats * INPUT_VECTOR_LEN

    w_scale = OUT_SCALE_MAX / (weight.max() - weight.min() + 1e-9)
    wq = jnp.clip(jnp.round(weight * w_scale), -QMAX, QMAX)

    x_p = jnp.pad(x, ((0, 0), (0, Dp - D)))
    w_p = jnp.pad(wq, ((0, Dp - D), (0, 0)))

    out = jnp.zeros((B, O), jnp.float32)
    for i in range(repeats):
        xi = x_p[:, i * INPUT_VECTOR_LEN:(i + 1) * INPUT_VECTOR_LEN]
        wi = w_p[i * INPUT_VECTOR_LEN:(i + 1) * INPUT_VECTOR_LEN, :]
        s = jnp.dot(xi, wi, precision=jax.lax.Precision.HIGHEST)
        s = jnp.clip(s, -128.0, 127.0)
        out = out + jnp.where(s < 0.0, 0.0, 1.0)
    if bias is not None:
        out = out + bias
    return out


if __name__ == "__main__":
    # Small shapes: input_dimension=100 (not a multiple of 64 -> repeats=2,
    # exercises the padding path), output_dimension=32, batch=8.
    B, D, O = 8, 100, 32

    key = jax.random.PRNGKey(0)
    kx, kw = jax.random.split(key)
    # OPU inputs are 4-bit quantized upstream -> use small-integer activations
    # (exactly representable in bf16, so kernel counts match the f32 reference
    # bit-for-bit).
    x = jax.random.randint(kx, (B, D), -8, 9).astype(jnp.float32)

    # Deterministic init matching kaiming_uniform_(a=sqrt(5)) on a (D, O)
    # tensor:  U(-1/sqrt(fan_in), 1/sqrt(fan_in)) with torch fan_in = O.
    bound = 1.0 / math.sqrt(O)
    weight = jax.random.uniform(kw, (D, O), minval=-bound, maxval=bound,
                                dtype=jnp.float32)

    out = onn_fc_forward(x, weight)          # add_bias=False (module default)
    out = jax.block_until_ready(out)

    ref = onn_fc_reference(x, weight)
    assert out.shape == (B, O)
    np.testing.assert_allclose(np.asarray(out), np.asarray(ref),
                               rtol=0, atol=1e-5)

    print("KERNEL_OK")
</pallas_src>

<mosaic_0001>
module attributes {stable_mosaic.version = 11 : i64} {
  func.func @onn_fc_kernel(%arg0: i32, %arg1: i32, %arg2: memref<8x128xbf16, #tpu.memory_space<vmem>>, %arg3: memref<128x32xbf16, #tpu.memory_space<vmem>>, %arg4: memref<8x32xf32, #tpu.memory_space<vmem>>) attributes {dimension_semantics = [#tpu.dimension_semantics<parallel>, #tpu.dimension_semantics<parallel>], iteration_bounds = array<i64: 1, 1>, scalar_prefetch = 0 : i64, scratch_operands = 0 : i64, tpu.core_type = #tpu.core_type<tc>, window_params = [{transform_indices = @transform_0, window_bounds = array<i64: 8, 128>}, {transform_indices = @transform_1, window_bounds = array<i64: 128, 32>}, {transform_indices = @transform_2, window_bounds = array<i64: 8, 32>}]} {
    %cst = arith.constant 0.000000e+00 : f32
    %0 = vector.broadcast %cst : f32 to vector<8x32xf32>
    %c0 = arith.constant 0 : index
    %c0_0 = arith.constant 0 : index
    %1 = vector.load %arg2[%c0, %c0_0] : memref<8x128xbf16, #tpu.memory_space<vmem>>, vector<8x64xbf16>
    %c0_1 = arith.constant 0 : index
    %c0_2 = arith.constant 0 : index
    %2 = vector.load %arg3[%c0_1, %c0_2] : memref<128x32xbf16, #tpu.memory_space<vmem>>, vector<64x32xbf16>
    %cst_3 = arith.constant dense<0.000000e+00> : vector<8x32xf32>
    %3 = tpu.matmul %1, %2, %cst_3 {dimension_numbers = #tpu.dot_dimension_numbers<[1], [0], [0], [1], [0, 0, 1, 1], [], []>} : vector<8x64xbf16>, vector<64x32xbf16>, vector<8x32xf32> -> vector<8x32xf32>
    %cst_4 = arith.constant 0.000000e+00 : f32
    %4 = vector.broadcast %cst_4 : f32 to vector<8x32xf32>
    %5 = arith.cmpf oge, %3, %4 : vector<8x32xf32>
    %6 = arith.extui %5 : vector<8x32xi1> to vector<8x32xi32>
    %7 = arith.sitofp %6 : vector<8x32xi32> to vector<8x32xf32>
    %8 = arith.addf %0, %7 : vector<8x32xf32>
    %c0_5 = arith.constant 0 : index
    %c64 = arith.constant 64 : index
    %9 = vector.load %arg2[%c0_5, %c64] : memref<8x128xbf16, #tpu.memory_space<vmem>>, vector<8x64xbf16>
    %c64_6 = arith.constant 64 : index
    %c0_7 = arith.constant 0 : index
    %10 = vector.load %arg3[%c64_6, %c0_7] : memref<128x32xbf16, #tpu.memory_space<vmem>>, vector<64x32xbf16>
    %cst_8 = arith.constant dense<0.000000e+00> : vector<8x32xf32>
    %11 = tpu.matmul %9, %10, %cst_8 {dimension_numbers = #tpu.dot_dimension_numbers<[1], [0], [0], [1], [0, 0, 1, 1], [], []>} : vector<8x64xbf16>, vector<64x32xbf16>, vector<8x32xf32> -> vector<8x32xf32>
    %cst_9 = arith.constant 0.000000e+00 : f32
    %12 = vector.broadcast %cst_9 : f32 to vector<8x32xf32>
    %13 = arith.cmpf oge, %11, %12 : vector<8x32xf32>
    %14 = arith.extui %13 : vector<8x32xi1> to vector<8x32xi32>
    %15 = arith.sitofp %14 : vector<8x32xi32> to vector<8x32xf32>
    %16 = arith.addf %8, %15 : vector<8x32xf32>
    %c0_10 = arith.constant 0 : index
    %c0_11 = arith.constant 0 : index
    %17 = vector.load %arg4[%c0_10, %c0_11] : memref<8x32xf32, #tpu.memory_space<vmem>>, vector<8x32xf32>
    tpu.vector_store %arg4[%c0_10, %c0_11], %16 {strides = array<i32>} : memref<8x32xf32, #tpu.memory_space<vmem>>, vector<8x32xf32>,
    return
  }
  func.func @transform_0(%arg0: i32, %arg1: i32) -> (i32, i32) {
    %c0_i32 = arith.constant 0 : i32
    %c0_i32_0 = arith.constant 0 : i32
    return %arg0, %c0_i32 : i32, i32
  }
  func.func @transform_1(%arg0: i32, %arg1: i32) -> (i32, i32) {
    %c0_i32 = arith.constant 0 : i32
    %c0_i32_0 = arith.constant 0 : i32
    return %c0_i32, %arg1 : i32, i32
  }
  func.func @transform_2(%arg0: i32, %arg1: i32) -> (i32, i32) {
    %c0_i32 = arith.constant 0 : i32
    return %arg0, %arg1 : i32, i32
  }
}

</mosaic_0001>

<llo_original>
// kernel: tpu_custom_call.1
$region0: #{tpu_custom_call.1}
  #allocation0 [shape = 'u32[]', space=smem, size = 0x4, offset = 0x4, fixed_abs, tag = 'smem constant byte address 0x4 - core index']
  #allocation1 [shape = 'u32[144,128]{1,0:T(1,128)}', space=vmem, size = 0x12000, scoped, tag = 'internal scratch']
  %s0 = inlined_call_operand.vmem [shape: bf16[8,128], index: 0, kind: input, shape index: {}]
  %s1 = inlined_call_operand.vmem [shape: bf16[128,32], index: 1, kind: input, shape index: {}]
  %s2 = inlined_call_operand.hbm [shape: f32[8,32], index: 2, kind: output, shape index: {}]
  %s3 = sld [smem:[#allocation0]]
  $region18: #{tpu_custom_call.1} parent=0
    _
  %s5 = ssub.s32 1, %s3
  %s6 = scalar_select 0, %s5, %s3
  $region1: #{tpu_custom_call.1} parent=0
    #allocation2 [shape = 'u8[4096]{0}', space=vmem, size = 0x1000, scoped, tag = 'output window, operand 0, single buffered']
    #allocation3 [shape = 's32[1]{0}', space=sflag, size = 0x4, scoped, tag = 'scoped memory for tpu_custom_call.1']
    %7 = vsyncpa [#allocation3], 0
    // Predicated region
    $region2: #{tpu_custom_call.1} parent=1 // pred_check
      _
    $region3: #{tpu_custom_call.1} parent=1 // pred_check_branch
      %9 = sbr.rel (0) target = $region5
    $region4: #{tpu_custom_call.1} parent=1 // pred_region
      _
    $region5: #{tpu_custom_call.1} parent=1 // pred_fallthru
      _
    // Predicated region
    $region6: #{tpu_custom_call.1} parent=1 // pred_check
      _
    $region7: #{tpu_custom_call.1} parent=1 // pred_check_branch
      %11 = sbr.rel (0) target = $region9
    $region8: #{tpu_custom_call.1} parent=1 // pred_region
      _
    $region9: #{tpu_custom_call.1} parent=1 // pred_fallthru
      _
    %v13 = vld [vmem:[%s0] sm:$0xf]
    %v14 = vld [vmem:[%s1] sm:$0xf]
    %v15 = vld [vmem:[%s1 + $0x4] sm:$0xf]
    %v16 = vld [vmem:[%s1 + $0x8] sm:$0xf]
    %v17 = vld [vmem:[%s1 + $0xc] sm:$0xf]
    %v18 = vld [vmem:[%s1 + $0x10] sm:$0xf]
    %v19 = vld [vmem:[%s1 + $0x14] sm:$0xf]
    %v20 = vld [vmem:[%s1 + $0x18] sm:$0xf]
    %v21 = vld [vmem:[%s1 + $0x1c] sm:$0xf]
    %v30 = vunpack.c.l.b16 %v14
    %v31 = vunpack.c.l.b16 %v15
    %v32 = vunpack.c.l.b16 %v16
    %v33 = vunpack.c.l.b16 %v17
    %v34 = vunpack.c.l.b16 %v18
    %v35 = vunpack.c.l.b16 %v19
    %v36 = vunpack.c.l.b16 %v20
    %v37 = vunpack.c.l.b16 %v21
    %v38 = vpack.c.b16 %v31, %v30
    %v39 = vpack.c.b16 %v33, %v32
    %v40 = vpack.c.b16 %v35, %v34
    %v41 = vpack.c.b16 %v37, %v36
    %vm46 = vcmask 523264
    %v48 = vsel %vm46, %v13, 0
    %50 = vmatprep.subr.bf16.mxu0 0
    %51 = vmatpush1.bf16.msra.mxu0 %v38
    %52 = vmatprep.subr.bf16.mxu0 0
    %53 = vmatpush1.bf16.msra.mxu0 %v39
    %54 = vmatprep.subr.bf16.mxu0 0
    %55 = vmatpush1.bf16.msra.mxu0 %v40
    %56 = vmatprep.subr.bf16.mxu0 0
    %57 = vmatpush1.bf16.msra.mxu0 %v41
    %58 = vmatprep.subr.bf16.mxu0 0
    %59 = vmatpush1.bf16.msra.mxu0 0
    %60 = vmatprep.subr.bf16.mxu0 0
    %61 = vmatpush1.bf16.msra.mxu0 0
    %62 = vmatprep.subr.bf16.mxu0 0
    %63 = vmatpush1.bf16.msra.mxu0 0
    %64 = vmatprep.subr.bf16.mxu0 0
    %65 = vmatpush1.bf16.msra.mxu0 0
    %66 = vmatprep.subr.bf16.mxu0 0
    %67 = vmatpush1.bf16.msra.mxu0 0
    %68 = vmatprep.subr.bf16.mxu0 0
    %69 = vmatpush1.bf16.msra.mxu0 0
    %70 = vmatprep.subr.bf16.mxu0 0
    %71 = vmatpush1.bf16.msra.mxu0 0
    %72 = vmatprep.subr.bf16.mxu0 0
    %73 = vmatpush1.bf16.msra.mxu0 0
    %74 = vmatprep.subr.bf16.mxu0 0
    %75 = vmatpush1.bf16.msra.mxu0 0
    %76 = vmatprep.subr.bf16.mxu0 0
    %77 = vmatpush1.bf16.msra.mxu0 0
    %78 = vmatprep.subr.bf16.mxu0 0
    %79 = vmatpush1.bf16.msra.mxu0 0
    %80 = vmatprep.subr.bf16.mxu0 0
    %81 = vmatpush1.bf16.msra.mxu0 0
    %82 = vmatprep.mubr.bf16.mxu0 0
    %83 = vmatmul.mubr.bf16.gmra.mrb[0].mxu0 %v48
    %v84 = vpop.f32.mrb[0].mxu0
    %v85 = vadd.f32 0.0, %v84
    %v86 = vpop.f32.mrb[0].mxu0
    %v87 = vpop.f32.mrb[0].mxu0
    %v88 = vpop.f32.mrb[0].mxu0
    %89 = vdwg.mxu0
    %vm90 = vcmp.ge.f32.partialorder %v85, 0.0
    %v91 = vsel %vm90, 1, 0
    %v92 = vcvt.s32.f32 %v91
    %v93 = vadd.f32 %v92, 0.0
    %v94 = vld [vmem:[%s1 + $0x20] sm:$0xf]
    %v95 = vld [vmem:[%s1 + $0x24] sm:$0xf]
    %v96 = vld [vmem:[%s1 + $0x28] sm:$0xf]
    %v97 = vld [vmem:[%s1 + $0x2c] sm:$0xf]
    %v98 = vld [vmem:[%s1 + $0x30] sm:$0xf]
    %v99 = vld [vmem:[%s1 + $0x34] sm:$0xf]
    %v100 = vld [vmem:[%s1 + $0x38] sm:$0xf]
    %v101 = vld [vmem:[%s1 + $0x3c] sm:$0xf]
    %v103 = vunpack.c.l.b16 %v13
    %v104 = vpack.c.b16 %v103, %v103
    %105 = vrot.lane.b32.xlu0 %v104, 64
    %v106 = vpop.permute.xlu0 %105
    %v115 = vunpack.c.l.b16 %v94
    %v116 = vunpack.c.l.b16 %v95
    %v117 = vunpack.c.l.b16 %v96
    %v118 = vunpack.c.l.b16 %v97
    %v119 = vunpack.c.l.b16 %v98
    %v120 = vunpack.c.l.b16 %v99
    %v121 = vunpack.c.l.b16 %v100
    %v122 = vunpack.c.l.b16 %v101
    %v123 = vpack.c.b16 %v116, %v115
    %v124 = vpack.c.b16 %v118, %v117
    %v125 = vpack.c.b16 %v120, %v119
    %v126 = vpack.c.b16 %v122, %v121
    %v132 = vsel %vm46, %v106, 0
    %134 = vmatprep.subr.bf16.mxu0 0
    %135 = vmatpush1.bf16.msra.mxu0 %v123
    %136 = vmatprep.subr.bf16.mxu0 0
    %137 = vmatpush1.bf16.msra.mxu0 %v124
    %138 = vmatprep.subr.bf16.mxu0 0
    %139 = vmatpush1.bf16.msra.mxu0 %v125
    %140 = vmatprep.subr.bf16.mxu0 0
    %141 = vmatpush1.bf16.msra.mxu0 %v126
    %142 = vmatprep.subr.bf16.mxu0 0
    %143 = vmatpush1.bf16.msra.mxu0 0
    %144 = vmatprep.subr.bf16.mxu0 0
    %145 = vmatpush1.bf16.msra.mxu0 0
    %146 = vmatprep.subr.bf16.mxu0 0
    %147 = vmatpush1.bf16.msra.mxu0 0
    %148 = vmatprep.subr.bf16.mxu0 0
    %149 = vmatpush1.bf16.msra.mxu0 0
    %150 = vmatprep.subr.bf16.mxu0 0
    %151 = vmatpush1.bf16.msra.mxu0 0
    %152 = vmatprep.subr.bf16.mxu0 0
    %153 = vmatpush1.bf16.msra.mxu0 0
    %154 = vmatprep.subr.bf16.mxu0 0
    %155 = vmatpush1.bf16.msra.mxu0 0
    %156 = vmatprep.subr.bf16.mxu0 0
    %157 = vmatpush1.bf16.msra.mxu0 0
    %158 = vmatprep.subr.bf16.mxu0 0
    %159 = vmatpush1.bf16.msra.mxu0 0
    %160 = vmatprep.subr.bf16.mxu0 0
    %161 = vmatpush1.bf16.msra.mxu0 0
    %162 = vmatprep.subr.bf16.mxu0 0
    %163 = vmatpush1.bf16.msra.mxu0 0
    %164 = vmatprep.subr.bf16.mxu0 0
    %165 = vmatpush1.bf16.msra.mxu0 0
    %166 = vmatprep.mubr.bf16.mxu0 0
    %167 = vmatmul.mubr.bf16.gmra.mrb[0].mxu0 %v132
    %v168 = vpop.f32.mrb[0].mxu0
    %v169 = vadd.f32 0.0, %v168
    %v170 = vpop.f32.mrb[0].mxu0
    %v171 = vpop.f32.mrb[0].mxu0
    %v172 = vpop.f32.mrb[0].mxu0
    %173 = vdwg.mxu0
    %vm174 = vcmp.ge.f32.partialorder %v169, 0.0
    %v175 = vsel %vm174, 1, 0
    %v176 = vcvt.s32.f32 %v175
    %v177 = vadd.f32 %v93, %v176
    %vm178 = vcmask 261120
    %179 = vst.msk [vmem:[#allocation2] sm:$0xff] %vm178, %v177
    // Predicated region
    $region10: #{tpu_custom_call.1} parent=1 // pred_check
      _
    $region11: #{tpu_custom_call.1} parent=1 // pred_check_branch
      %181 = sbr.rel (0) target = $region13
    $region12: #{tpu_custom_call.1} parent=1 // pred_region
      %s183 = ssub.s32 128, 128
      %184 = vsyncadd [#allocation3], %s183
      %s186 = sshll.u32 [#allocation2], 4
      %s187 = int_to_ptr.vmem [resolvable:$true] %s186
      %189 = dma.vmem_to_hbm [thread:$0]  %s187, 128, %s2, [#allocation3]
    $region13: #{tpu_custom_call.1} parent=1 // pred_fallthru
      _
    // Predicated region
    $region14: #{tpu_custom_call.1} parent=1 // pred_check
      _
    $region15: #{tpu_custom_call.1} parent=1 // pred_check_branch
      %191 = sbr.rel (0) target = $region17
    $region16: #{tpu_custom_call.1} parent=1 // pred_region
      %192 = dma.done [#allocation3], 128
    $region17: #{tpu_custom_call.1} parent=1 // pred_fallthru
      _
    %193 = vsyncpa [#allocation3], 1

</llo_original>
